<compile_context>
chip_gen: v7x
topology: tpu7x:2x2x1
jax: 0.10.0
libtpu: 0.0.40
codegen_flags: <defaults>
</compile_context>

<pallas_src>
import functools
import math

import jax
import jax.numpy as jnp
from jax.experimental import pallas as pl
from jax.experimental.pallas import tpu as pltpu


# ----------------------------------------------------------------------------- helpers
def _round_up(x, m):
    return ((x + m - 1) // m) * m


def _tpu_vmem_and_cores():
    """Per-TensorCore VMEM capacity + a 'multiple TCs per chip' heuristic."""
    vmem = None
    try:
        info = pltpu.get_tpu_info()
        v = int(getattr(info, "vmem_capacity_bytes", 0) or 0)
        if v > 0:
            vmem = v
    except Exception:
        vmem = None
    if vmem is None:
        vmem = 64 * 1024 * 1024  # conservative: v7x per-TC VMEM
    # v7x: 64 MiB/TC and 2 TCs per chip; v5e/v6e: 128 MiB, single TC.
    multi_core = vmem <= 96 * 1024 * 1024
    return vmem, multi_core


def _blk_bytes(rows, cols, sub, itemsize):
    """VMEM footprint of one (rows, cols) block after (sub, 128) layout padding."""
    return _round_up(max(int(rows), 1), sub) * _round_up(max(int(cols), 1), 128) * itemsize


def _vmem_needed(tm, tk, tn, xbytes, wbytes, obytes, w_bufs, b_bufs):
    sub_x = max(8, 32 // xbytes)
    sub_w = max(8, 32 // wbytes)
    sub_o = max(8, 32 // obytes)
    x_b = 2 * _blk_bytes(tm, tk, sub_x, xbytes)          # double-buffered activations
    w_b = w_bufs * _blk_bytes(tk, tn, sub_w, wbytes)     # weight tile
    b_b = b_bufs * _blk_bytes(1, tn, 8, 4)               # bias row (f32)
    o_b = 2 * _blk_bytes(tm, tn, sub_o, obytes)          # output tile
    acc_b = _blk_bytes(tm, tn, 8, 4)                     # f32 accumulator scratch
    return x_b + w_b + b_b + o_b + acc_b


def _plan_tiles(M, K, N, xbytes, wbytes, obytes, vmem_cap, multi_core, max_tm):
    """Byte-budgeted (tm, tk, tn) choice (~70% of per-generation VMEM)."""
    budget = int(0.70 * vmem_cap)
    sub_x = max(8, 32 // xbytes)

    # Row-tile candidates.
    if M <= sub_x:
        tm_cands = [M]
    else:
        tm_cap = max_tm if max_tm is not None else 2048
        if multi_core and M > 4 * sub_x:
            # v7x: aim for >=4 evenly sized M steps so both TensorCores stay busy.
            tm_cap = min(tm_cap, _round_up(pl.cdiv(M, 4), sub_x))
        t = _round_up(max(min(M, tm_cap), sub_x), sub_x)
        tm_cands = []
        while t > sub_x:
            tm_cands.append(t)
            t = _round_up(t // 2, sub_x)
        tm_cands.append(sub_x)

    # Latent-dim (output column) tiles: prefer the full, lane-dense width.
    tn_cands = [N] + [c for c in (2048, 1024, 512, 256, 128) if c < N]
    # Reduction (input_dim) tiles: prefer fully-resident K.
    tk_cands = [K] + [c for c in (1024, 512) if c < K]

    def search(min_tm, min_tn):
        for tk in tk_cands:
            for tn in tn_cands:
                if tn < min_tn:
                    continue
                for tm in tm_cands:
                    if tm < min_tm:
                        continue
                    gj = pl.cdiv(N, tn)
                    gk = pl.cdiv(K, tk)
                    w_bufs = 1 if (gj == 1 and gk == 1) else 2
                    b_bufs = 1 if gj == 1 else 2
                    if _vmem_needed(tm, tk, tn, xbytes, wbytes, obytes,
                                    w_bufs, b_bufs) <= budget:
                        return tm, tk, tn
        return None

    # First pass: insist on reasonably sized tm/tn (avoid pathological tiny tiles
    # caused by keeping a huge K fully resident); second pass: anything that fits.
    plan = search(min(256, tm_cands[0]), min(N, 512))
    if plan is None:
        plan = search(0, 0)
    if plan is None:
        plan = (tm_cands[-1], tk_cands[-1], tn_cands[-1])
    return plan


# ----------------------------------------------------------------------------- kernel
def _linear_kernel(x_ref, w_ref, b_ref, o_ref, acc_ref, *, compute_dtype):
    # x_ref : (tm, tk)  activation tile, caller dtype (cast on-chip)
    # w_ref : (tk, tn)  weight tile, already (K, N) layout, caller dtype
    # b_ref : (1, tn)   bias row (f32)
    # o_ref : (tm, tn)  output tile (caller dtype)
    # acc_ref: (tm, tn) f32 accumulator scratch (resident across the K axis)
    k_step = pl.program_id(2)

    @pl.when(k_step == 0)
    def _():
        acc_ref[...] = jnp.zeros_like(acc_ref)

    # In-kernel cast to the MXU compute dtype keeps HBM traffic in the caller's
    # dtype; accumulation stays f32.
    acc_ref[...] += jnp.dot(
        x_ref[...].astype(compute_dtype),
        w_ref[...].astype(compute_dtype),
        preferred_element_type=jnp.float32,
    )

    @pl.when(k_step == pl.num_programs(2) - 1)
    def _():
        o_ref[...] = (acc_ref[...] + b_ref[...].astype(jnp.float32)).astype(o_ref.dtype)


# ----------------------------------------------------------------------------- wrapper
def input_encoder_forward(x, weight, bias, *, compute_dtype=jnp.bfloat16, max_tm=None):
    """y = x @ weight.T + bias, matching torch.nn.Linear / InputEncoder.forward.

    x      : (..., input_dim)
    weight : (latent_dim, input_dim)   (PyTorch convention, passed untransposed)
    bias   : (latent_dim,)
    returns: (..., latent_dim), in x.dtype
    """
    out_dim, in_dim = weight.shape
    assert x.shape[-1] == in_dim

    lead_shape = x.shape[:-1]
    M = int(math.prod(lead_shape)) if lead_shape else 1
    x2 = x.reshape(M, in_dim)
    out_dtype = x.dtype

    xbytes = jnp.dtype(x2.dtype).itemsize
    wbytes = jnp.dtype(weight.dtype).itemsize
    obytes = jnp.dtype(out_dtype).itemsize

    vmem_cap, multi_core = _tpu_vmem_and_cores()
    tm, tk, tn = _plan_tiles(M, in_dim, out_dim, xbytes, wbytes, obytes,
                             vmem_cap, multi_core, max_tm)

    # One-time wrapper transpose -> canonical (tm,K)@(K,tn) contraction on the MXU.
    w_kn = jnp.transpose(weight)                      # (K, N), dtype unchanged
    b2 = bias.astype(jnp.float32).reshape(1, out_dim)

    # K is a reduction axis: a ragged last K block would feed garbage into valid
    # outputs, so zero-pad K when it is tiled and not divisible (exact math).
    K_eff = in_dim
    gk = pl.cdiv(in_dim, tk)
    if gk > 1 and in_dim % tk != 0:
        K_eff = gk * tk
        x2 = jnp.pad(x2, ((0, 0), (0, K_eff - in_dim)))
        w_kn = jnp.pad(w_kn, ((0, K_eff - in_dim), (0, 0)))

    gi = pl.cdiv(M, tm)
    gj = pl.cdiv(out_dim, tn)

    # When K is resident (gk == 1), pick the loop order that re-streams fewer
    # bytes: i-outer re-reads W (gi-1) times, j-outer re-reads x (gj-1) times.
    if gk == 1 and gi > 1 and gj > 1:
        i_outer = (gi - 1) * out_dim * K_eff * wbytes <= (gj - 1) * M * K_eff * xbytes
    else:
        i_outer = True

    if i_outer:
        grid = (gi, gj, gk)
        x_map = lambda i, j, k: (i, k)
        w_map = lambda i, j, k: (k, j)
        b_map = lambda i, j, k: (0, j)
        o_map = lambda i, j, k: (i, j)
    else:
        grid = (gj, gi, gk)
        x_map = lambda j, i, k: (i, k)
        w_map = lambda j, i, k: (k, j)
        b_map = lambda j, i, k: (0, j)
        o_map = lambda j, i, k: (i, j)

    # Grid-invariant blocks do not benefit from double buffering.
    w_single = (gj == 1 and gk == 1)
    b_single = (gj == 1)
    w_bufs = 1 if w_single else 2
    b_bufs = 1 if b_single else 2

    vmem_needed = _vmem_needed(tm, tk, tn, xbytes, wbytes, obytes, w_bufs, b_bufs)
    vmem_limit = int(min(0.9 * vmem_cap, max(32 * 1024 * 1024,
                                             vmem_needed + 8 * 1024 * 1024)))

    # Honest streamed-bytes estimate (includes re-stream factors, native dtypes).
    if gk == 1:
        x_bytes_hbm = (1 if i_outer else gj) * M * K_eff * xbytes
        w_bytes_hbm = (gi if i_outer else 1) * out_dim * K_eff * wbytes
    else:
        x_bytes_hbm = gj * M * K_eff * xbytes
        w_bytes_hbm = gi * out_dim * K_eff * wbytes
    cost = pl.CostEstimate(
        flops=2 * M * K_eff * out_dim,
        transcendentals=0,
        bytes_accessed=int(x_bytes_hbm + w_bytes_hbm + out_dim * 4 + M * out_dim * obytes),
    )

    kernel = functools.partial(_linear_kernel, compute_dtype=compute_dtype)

    def build_call(use_single_buffer):
        def spec(shape, imap, single):
            if single and use_single_buffer:
                return pl.BlockSpec(shape, imap, pipeline_mode=pl.Buffered(1))
            return pl.BlockSpec(shape, imap)

        return pl.pallas_call(
            kernel,
            out_shape=jax.ShapeDtypeStruct((M, out_dim), out_dtype),
            grid_spec=pltpu.PrefetchScalarGridSpec(
                num_scalar_prefetch=0,
                grid=grid,
                in_specs=[
                    pl.BlockSpec((tm, tk), x_map),
                    spec((tk, tn), w_map, w_single),
                    spec((1, tn), b_map, b_single),
                ],
                out_specs=pl.BlockSpec((tm, tn), o_map),
                scratch_shapes=[pltpu.VMEM((tm, tn), jnp.float32)],
            ),
            compiler_params=pltpu.CompilerParams(
                dimension_semantics=("parallel", "parallel", "arbitrary"),
                vmem_limit_bytes=vmem_limit,
            ),
            cost_estimate=cost,
        )

    try:
        out = build_call(True)(x2, w_kn, b2)
    except Exception:
        # Fallback if pipeline_mode=pl.Buffered(1) is rejected on this jax build.
        out = build_call(False)(x2, w_kn, b2)

    return out.reshape(*lead_shape, out_dim)


def init_input_encoder_params(key, input_dim, latent_dim, dtype=jnp.float32):
    """Deterministic init mimicking nn.Linear defaults (kaiming-uniform-ish)."""
    k_w, k_b = jax.random.split(key)
    bound = 1.0 / math.sqrt(input_dim)
    weight = jax.random.uniform(
        k_w, (latent_dim, input_dim), dtype=dtype, minval=-bound, maxval=bound
    )
    bias = jax.random.uniform(
        k_b, (latent_dim,), dtype=dtype, minval=-bound, maxval=bound
    )
    return weight, bias


if __name__ == "__main__":
    key = jax.random.PRNGKey(0)
    k_x, k_p = jax.random.split(key)

    # M = 3*7 = 21 -> non-(8,128)-aligned leading dims.
    batch, seq, input_dim, latent_dim = 3, 7, 16, 32
    x = jax.random.normal(k_x, (batch, seq, input_dim), dtype=jnp.float32)
    weight, bias = init_input_encoder_params(k_p, input_dim, latent_dim)

    # Default (single-block) path.
    y = input_encoder_forward(x, weight, bias)
    y = jax.block_until_ready(y)

    # Force a multi-step M grid with a ragged last block (exercises masked
    # writeback + the grid-invariant single-buffered weight/bias path).
    y_tiled = input_encoder_forward(x, weight, bias, max_tm=8)
    y_tiled = jax.block_until_ready(y_tiled)

    # Reference matching the kernel's compute recipe (bf16 inputs, f32 accum).
    y_ref_bf16 = (
        jnp.dot(
            x.astype(jnp.bfloat16),
            weight.astype(jnp.bfloat16).T,
            preferred_element_type=jnp.float32,
        )
        + bias
    ).astype(x.dtype)
    # Full-f32 nn.Linear semantics sanity check (looser tolerance due to bf16).
    y_ref_f32 = x @ weight.T + bias

    assert y.shape == (batch, seq, latent_dim)
    assert y_tiled.shape == (batch, seq, latent_dim)
    assert jnp.allclose(y, y_tiled, atol=1e-5, rtol=1e-5)
    assert jnp.allclose(y, y_ref_bf16, atol=2e-3, rtol=2e-3)
    assert jnp.allclose(y, y_ref_f32, atol=5e-2, rtol=5e-2)

    print("KERNEL_OK")
</pallas_src>

<mosaic_0001>
module attributes {stable_mosaic.version = 11 : i64} {
  func.func @_linear_kernel(%arg0: i32, %arg1: i32, %arg2: i32, %arg3: memref<24x16xf32, #tpu.memory_space<vmem>>, %arg4: memref<16x32xf32, #tpu.memory_space<vmem>>, %arg5: memref<1x32xf32, #tpu.memory_space<vmem>>, %arg6: memref<24x32xf32, #tpu.memory_space<vmem>>, %arg7: memref<24x32xf32, #tpu.memory_space<vmem>>) attributes {dimension_semantics = [#tpu.dimension_semantics<parallel>, #tpu.dimension_semantics<parallel>, #tpu.dimension_semantics<arbitrary>], iteration_bounds = array<i64: 1, 1, 1>, scalar_prefetch = 0 : i64, scratch_operands = 1 : i64, tpu.core_type = #tpu.core_type<tc>, window_params = [{transform_indices = @transform_0, window_bounds = array<i64: 24, 16>}, {pipeline_mode = #tpu.pipeline_mode<synchronous>, transform_indices = @transform_1, window_bounds = array<i64: 16, 32>}, {pipeline_mode = #tpu.pipeline_mode<synchronous>, transform_indices = @transform_2, window_bounds = array<i64: 1, 32>}, {transform_indices = @transform_3, window_bounds = array<i64: 24, 32>}]} {
    %c0_i32 = arith.constant 0 : i32
    %0 = arith.cmpi eq, %arg2, %c0_i32 : i32
    %1 = arith.extui %0 : i1 to i32
    %c0_i32_0 = arith.constant 0 : i32
    %2 = arith.cmpi ne, %1, %c0_i32_0 : i32
    scf.if %2 {
      %cst_10 = arith.constant 0.000000e+00 : f32
      %14 = vector.broadcast %cst_10 : f32 to vector<24x32xf32>
      %c0_11 = arith.constant 0 : index
      %c0_12 = arith.constant 0 : index
      %15 = vector.load %arg7[%c0_11, %c0_12] : memref<24x32xf32, #tpu.memory_space<vmem>>, vector<24x32xf32>
      tpu.vector_store %arg7[%c0_11, %c0_12], %14 {strides = array<i32>} : memref<24x32xf32, #tpu.memory_space<vmem>>, vector<24x32xf32>,
    } else {
    }
    %c0 = arith.constant 0 : index
    %c0_1 = arith.constant 0 : index
    %3 = vector.load %arg7[%c0, %c0_1] : memref<24x32xf32, #tpu.memory_space<vmem>>, vector<24x32xf32>
    %c0_2 = arith.constant 0 : index
    %c0_3 = arith.constant 0 : index
    %4 = vector.load %arg3[%c0_2, %c0_3] : memref<24x16xf32, #tpu.memory_space<vmem>>, vector<24x16xf32>
    %5 = arith.truncf %4 : vector<24x16xf32> to vector<24x16xbf16>
    %c0_4 = arith.constant 0 : index
    %c0_5 = arith.constant 0 : index
    %6 = vector.load %arg4[%c0_4, %c0_5] : memref<16x32xf32, #tpu.memory_space<vmem>>, vector<16x32xf32>
    %7 = arith.truncf %6 : vector<16x32xf32> to vector<16x32xbf16>
    %cst = arith.constant dense<0.000000e+00> : vector<24x32xf32>
    %8 = tpu.matmul %5, %7, %cst {dimension_numbers = #tpu.dot_dimension_numbers<[1], [0], [0], [1], [0, 0, 1, 1], [], []>} : vector<24x16xbf16>, vector<16x32xbf16>, vector<24x32xf32> -> vector<24x32xf32>
    %9 = arith.addf %3, %8 : vector<24x32xf32>
    %c0_6 = arith.constant 0 : index
    %c0_7 = arith.constant 0 : index
    %10 = vector.load %arg7[%c0_6, %c0_7] : memref<24x32xf32, #tpu.memory_space<vmem>>, vector<24x32xf32>
    tpu.vector_store %arg7[%c0_6, %c0_7], %9 {strides = array<i32>} : memref<24x32xf32, #tpu.memory_space<vmem>>, vector<24x32xf32>,
    %c0_i32_8 = arith.constant 0 : i32
    %11 = arith.cmpi eq, %arg2, %c0_i32_8 : i32
    %12 = arith.extui %11 : i1 to i32
    %c0_i32_9 = arith.constant 0 : i32
    %13 = arith.cmpi ne, %12, %c0_i32_9 : i32
    scf.if %13 {
      %c0_10 = arith.constant 0 : index
      %c0_11 = arith.constant 0 : index
      %14 = vector.load %arg7[%c0_10, %c0_11] : memref<24x32xf32, #tpu.memory_space<vmem>>, vector<24x32xf32>
      %c0_12 = arith.constant 0 : index
      %c0_13 = arith.constant 0 : index
      %15 = vector.load %arg5[%c0_12, %c0_13] : memref<1x32xf32, #tpu.memory_space<vmem>>, vector<1x32xf32>
      %16 = vector.broadcast %15 : vector<1x32xf32> to vector<24x32xf32>
      %17 = arith.addf %14, %16 : vector<24x32xf32>
      %c0_14 = arith.constant 0 : index
      %c0_15 = arith.constant 0 : index
      %18 = vector.load %arg6[%c0_14, %c0_15] : memref<24x32xf32, #tpu.memory_space<vmem>>, vector<24x32xf32>
      tpu.vector_store %arg6[%c0_14, %c0_15], %17 {strides = array<i32>} : memref<24x32xf32, #tpu.memory_space<vmem>>, vector<24x32xf32>,
    } else {
    }
    return
  }
  func.func @transform_0(%arg0: i32, %arg1: i32, %arg2: i32) -> (i32, i32) {
    %c0_i32 = arith.constant 0 : i32
    return %arg0, %arg2 : i32, i32
  }
  func.func @transform_1(%arg0: i32, %arg1: i32, %arg2: i32) -> (i32, i32) {
    %c0_i32 = arith.constant 0 : i32
    return %arg2, %arg1 : i32, i32
  }
  func.func @transform_2(%arg0: i32, %arg1: i32, %arg2: i32) -> (i32, i32) {
    %c0_i32 = arith.constant 0 : i32
    %c0_i32_0 = arith.constant 0 : i32
    return %c0_i32, %arg1 : i32, i32
  }
  func.func @transform_3(%arg0: i32, %arg1: i32, %arg2: i32) -> (i32, i32) {
    %c0_i32 = arith.constant 0 : i32
    return %arg0, %arg1 : i32, i32
  }
}

module attributes {stable_mosaic.version = 11 : i64} {
  func.func @_linear_kernel(%arg0: i32, %arg1: i32, %arg2: i32, %arg3: memref<24x16xf32, #tpu.memory_space<vmem>>, %arg4: memref<16x32xf32, #tpu.memory_space<vmem>>, %arg5: memref<1x32xf32, #tpu.memory_space<vmem>>, %arg6: memref<24x32xf32, #tpu.memory_space<vmem>>, %arg7: memref<24x32xf32, #tpu.memory_space<vmem>>) attributes {dimension_semantics = [#tpu.dimension_semantics<parallel>, #tpu.dimension_semantics<parallel>, #tpu.dimension_semantics<arbitrary>], iteration_bounds = array<i64: 1, 1, 1>, scalar_prefetch = 0 : i64, scratch_operands = 1 : i64, tpu.core_type = #tpu.core_type<tc>, window_params = [{transform_indices = @transform_0, window_bounds = array<i64: 24, 16>}, {transform_indices = @transform_1, window_bounds = array<i64: 16, 32>}, {transform_indices = @transform_2, window_bounds = array<i64: 1, 32>}, {transform_indices = @transform_3, window_bounds = array<i64: 24, 32>}]} {
    %c0_i32 = arith.constant 0 : i32
    %0 = arith.cmpi eq, %arg2, %c0_i32 : i32
    %1 = arith.extui %0 : i1 to i32
    %c0_i32_0 = arith.constant 0 : i32
    %2 = arith.cmpi ne, %1, %c0_i32_0 : i32
    scf.if %2 {
      %cst_10 = arith.constant 0.000000e+00 : f32
      %14 = vector.broadcast %cst_10 : f32 to vector<24x32xf32>
      %c0_11 = arith.constant 0 : index
      %c0_12 = arith.constant 0 : index
      %15 = vector.load %arg7[%c0_11, %c0_12] : memref<24x32xf32, #tpu.memory_space<vmem>>, vector<24x32xf32>
      tpu.vector_store %arg7[%c0_11, %c0_12], %14 {strides = array<i32>} : memref<24x32xf32, #tpu.memory_space<vmem>>, vector<24x32xf32>,
    } else {
    }
    %c0 = arith.constant 0 : index
    %c0_1 = arith.constant 0 : index
    %3 = vector.load %arg7[%c0, %c0_1] : memref<24x32xf32, #tpu.memory_space<vmem>>, vector<24x32xf32>
    %c0_2 = arith.constant 0 : index
    %c0_3 = arith.constant 0 : index
    %4 = vector.load %arg3[%c0_2, %c0_3] : memref<24x16xf32, #tpu.memory_space<vmem>>, vector<24x16xf32>
    %5 = arith.truncf %4 : vector<24x16xf32> to vector<24x16xbf16>
    %c0_4 = arith.constant 0 : index
    %c0_5 = arith.constant 0 : index
    %6 = vector.load %arg4[%c0_4, %c0_5] : memref<16x32xf32, #tpu.memory_space<vmem>>, vector<16x32xf32>
    %7 = arith.truncf %6 : vector<16x32xf32> to vector<16x32xbf16>
    %cst = arith.constant dense<0.000000e+00> : vector<24x32xf32>
    %8 = tpu.matmul %5, %7, %cst {dimension_numbers = #tpu.dot_dimension_numbers<[1], [0], [0], [1], [0, 0, 1, 1], [], []>} : vector<24x16xbf16>, vector<16x32xbf16>, vector<24x32xf32> -> vector<24x32xf32>
    %9 = arith.addf %3, %8 : vector<24x32xf32>
    %c0_6 = arith.constant 0 : index
    %c0_7 = arith.constant 0 : index
    %10 = vector.load %arg7[%c0_6, %c0_7] : memref<24x32xf32, #tpu.memory_space<vmem>>, vector<24x32xf32>
    tpu.vector_store %arg7[%c0_6, %c0_7], %9 {strides = array<i32>} : memref<24x32xf32, #tpu.memory_space<vmem>>, vector<24x32xf32>,
    %c0_i32_8 = arith.constant 0 : i32
    %11 = arith.cmpi eq, %arg2, %c0_i32_8 : i32
    %12 = arith.extui %11 : i1 to i32
    %c0_i32_9 = arith.constant 0 : i32
    %13 = arith.cmpi ne, %12, %c0_i32_9 : i32
    scf.if %13 {
      %c0_10 = arith.constant 0 : index
      %c0_11 = arith.constant 0 : index
      %14 = vector.load %arg7[%c0_10, %c0_11] : memref<24x32xf32, #tpu.memory_space<vmem>>, vector<24x32xf32>
      %c0_12 = arith.constant 0 : index
      %c0_13 = arith.constant 0 : index
      %15 = vector.load %arg5[%c0_12, %c0_13] : memref<1x32xf32, #tpu.memory_space<vmem>>, vector<1x32xf32>
      %16 = vector.broadcast %15 : vector<1x32xf32> to vector<24x32xf32>
      %17 = arith.addf %14, %16 : vector<24x32xf32>
      %c0_14 = arith.constant 0 : index
      %c0_15 = arith.constant 0 : index
      %18 = vector.load %arg6[%c0_14, %c0_15] : memref<24x32xf32, #tpu.memory_space<vmem>>, vector<24x32xf32>
      tpu.vector_store %arg6[%c0_14, %c0_15], %17 {strides = array<i32>} : memref<24x32xf32, #tpu.memory_space<vmem>>, vector<24x32xf32>,
    } else {
    }
    return
  }
  func.func @transform_0(%arg0: i32, %arg1: i32, %arg2: i32) -> (i32, i32) {
    %c0_i32 = arith.constant 0 : i32
    return %arg0, %arg2 : i32, i32
  }
  func.func @transform_1(%arg0: i32, %arg1: i32, %arg2: i32) -> (i32, i32) {
    %c0_i32 = arith.constant 0 : i32
    return %arg2, %arg1 : i32, i32
  }
  func.func @transform_2(%arg0: i32, %arg1: i32, %arg2: i32) -> (i32, i32) {
    %c0_i32 = arith.constant 0 : i32
    %c0_i32_0 = arith.constant 0 : i32
    return %c0_i32, %arg1 : i32, i32
  }
  func.func @transform_3(%arg0: i32, %arg1: i32, %arg2: i32) -> (i32, i32) {
    %c0_i32 = arith.constant 0 : i32
    return %arg0, %arg1 : i32, i32
  }
}

</mosaic_0001>

<llo_original>
// kernel: tpu_custom_call.1
$region0: #{tpu_custom_call.1}
  #allocation0 [shape = 'u32[]', space=smem, size = 0x4, offset = 0x4, fixed_abs, tag = 'smem constant byte address 0x4 - core index']
  #allocation1 [shape = 'u32[144,128]{1,0:T(1,128)}', space=vmem, size = 0x12000, scoped, tag = 'internal scratch']
  #allocation2 [shape = 'f32[24,32]{1,0:T(8,128)}', space=vmem, size = 0x3000, scoped, tag = 'scratch operand']
  %s0 = inlined_call_operand.vmem [shape: f32[21,16], index: 0, kind: input, shape index: {}]
  %s1 = inlined_call_operand.vmem [shape: f32[16,32], index: 1, kind: input, shape index: {}]
  %s2 = inlined_call_operand.vmem [shape: f32[1,32], index: 2, kind: input, shape index: {}]
  %s3 = inlined_call_operand.hbm [shape: f32[21,32], index: 3, kind: output, shape index: {}]
  %s4 = sld [smem:[#allocation0]]
  $region30: #{tpu_custom_call.1} parent=0
    _
  %s6 = ssub.s32 1, %s4
  %s7 = scalar_select 0, %s6, %s4
  $region1: #{tpu_custom_call.1} parent=0
    #allocation3 [shape = 'u8[12288]{0}', space=vmem, size = 0x3000, scoped, tag = 'output window, operand 0, single buffered']
    #allocation4 [shape = 's32[1]{0}', space=sflag, size = 0x4, scoped, tag = 'scoped memory for tpu_custom_call.1']
    %8 = vsyncpa [#allocation4], 0
    // Predicated region
    $region2: #{tpu_custom_call.1} parent=1 // pred_check
      _
    $region3: #{tpu_custom_call.1} parent=1 // pred_check_branch
      %10 = sbr.rel (0) target = $region5
    $region4: #{tpu_custom_call.1} parent=1 // pred_region
      _
    $region5: #{tpu_custom_call.1} parent=1 // pred_fallthru
      _
    // Predicated region
    $region6: #{tpu_custom_call.1} parent=1 // pred_check
      _
    $region7: #{tpu_custom_call.1} parent=1 // pred_check_branch
      %12 = sbr.rel (0) target = $region9
    $region8: #{tpu_custom_call.1} parent=1 // pred_region
      _
    $region9: #{tpu_custom_call.1} parent=1 // pred_fallthru
      _
    // Predicated region
    $region10: #{tpu_custom_call.1} parent=1 // pred_check
      _
    $region11: #{tpu_custom_call.1} parent=1 // pred_check_branch
      %14 = sbr.rel (0) target = $region13
    $region12: #{tpu_custom_call.1} parent=1 // pred_region
      _
    $region13: #{tpu_custom_call.1} parent=1 // pred_fallthru
      _
    %p16 = scmp.eq.s32.totalorder 0, 0
    // Predicated region
    $region14: #{tpu_custom_call.1} parent=1 // pred_check
      %p17 = pneg %p16
    $region15: #{tpu_custom_call.1} parent=1 // pred_check_branch
      %19 = sbr.rel (%p17) target = $region17
    $region16: #{tpu_custom_call.1} parent=1 // pred_region
      %vm20 = vcmask 261120
      %21 = vst.msk [vmem:[#allocation2] sm:$0xff] %vm20, 0.0
      %22 = vst.msk [vmem:[#allocation2 + $0x8] sm:$0xff] %vm20, 0.0
      %23 = vst.msk [vmem:[#allocation2 + $0x10] sm:$0xff] %vm20, 0.0
    $region17: #{tpu_custom_call.1} parent=1 // pred_fallthru
      _
    %v24 = vld [vmem:[#allocation2] sm:$0xff]
    %v25 = vld [vmem:[#allocation2 + $0x8] sm:$0xff]
    %v26 = vld [vmem:[#allocation2 + $0x10] sm:$0xff]
    %v27 = vld [vmem:[%s0] sm:$0xff]
    %v28 = vld [vmem:[%s0 + $0x8] sm:$0xff]
    %v29 = vld [vmem:[%s0 + $0x10] sm:$0xff]
    %v30 = vpack.c.bf16 %v28, %v27
    %v31 = vpack.c.bf16 %v29, %v29
    %v32 = vld [vmem:[%s1] sm:$0xff]
    %v33 = vld [vmem:[%s1 + $0x8] sm:$0xff]
    %v34 = vpack.c.bf16 %v33, %v32
    %vm35 = vcmask 130048
    %v37 = vsel %vm35, %v30, 0
    %v40 = vsel %vm35, %v31, 0
    %42 = vmatprep.subr.bf16.mxu0 0
    %43 = vmatpush1.bf16.msra.mxu0 %v34
    %44 = vmatprep.subr.bf16.mxu0 0
    %45 = vmatpush1.bf16.msra.mxu0 0
    %46 = vmatprep.subr.bf16.mxu0 0
    %47 = vmatpush1.bf16.msra.mxu0 0
    %48 = vmatprep.subr.bf16.mxu0 0
    %49 = vmatpush1.bf16.msra.mxu0 0
    %50 = vmatprep.subr.bf16.mxu0 0
    %51 = vmatpush1.bf16.msra.mxu0 0
    %52 = vmatprep.subr.bf16.mxu0 0
    %53 = vmatpush1.bf16.msra.mxu0 0
    %54 = vmatprep.subr.bf16.mxu0 0
    %55 = vmatpush1.bf16.msra.mxu0 0
    %56 = vmatprep.subr.bf16.mxu0 0
    %57 = vmatpush1.bf16.msra.mxu0 0
    %58 = vmatprep.subr.bf16.mxu0 0
    %59 = vmatpush1.bf16.msra.mxu0 0
    %60 = vmatprep.subr.bf16.mxu0 0
    %61 = vmatpush1.bf16.msra.mxu0 0
    %62 = vmatprep.subr.bf16.mxu0 0
    %63 = vmatpush1.bf16.msra.mxu0 0
    %64 = vmatprep.subr.bf16.mxu0 0
    %65 = vmatpush1.bf16.msra.mxu0 0
    %66 = vmatprep.subr.bf16.mxu0 0
    %67 = vmatpush1.bf16.msra.mxu0 0
    %68 = vmatprep.subr.bf16.mxu0 0
    %69 = vmatpush1.bf16.msra.mxu0 0
    %70 = vmatprep.subr.bf16.mxu0 0
    %71 = vmatpush1.bf16.msra.mxu0 0
    %72 = vmatprep.subr.bf16.mxu0 0
    %73 = vmatpush1.bf16.msra.mxu0 0
    %74 = vmatprep.mubr.bf16.mxu0 0
    %75 = vmatmul.mubr.bf16.gmra.mrb[0].mxu0 %v37
    %v76 = vpop.f32.mrb[0].mxu0
    %v77 = vadd.f32 0.0, %v76
    %v78 = vpop.f32.mrb[0].mxu0
    %v79 = vpop.f32.mrb[0].mxu0
    %v80 = vadd.f32 0.0, %v79
    %v81 = vpop.f32.mrb[0].mxu0
    %82 = vmatprep.mubr.bf16.mxu0 0
    %83 = vmatmul.mubr.bf16.gmra.mrb[0].mxu0 %v40
    %v84 = vpop.f32.mrb[0].mxu0
    %v85 = vadd.f32 0.0, %v84
    %v86 = vpop.f32.mrb[0].mxu0
    %v87 = vpop.f32.mrb[0].mxu0
    %v88 = vpop.f32.mrb[0].mxu0
    %89 = vdwg.mxu0
    %v90 = vadd.f32 %v24, %v77
    %v91 = vadd.f32 %v25, %v80
    %v92 = vadd.f32 %v26, %v85
    %vm93 = vcmask 261120
    %94 = vst.msk [vmem:[#allocation2] sm:$0xff] %vm93, %v90
    %95 = vst.msk [vmem:[#allocation2 + $0x8] sm:$0xff] %vm93, %v91
    %96 = vst.msk [vmem:[#allocation2 + $0x10] sm:$0xff] %vm93, %v92
    // Predicated region
    $region18: #{tpu_custom_call.1} parent=1 // pred_check
      %p97 = pneg %p16
    $region19: #{tpu_custom_call.1} parent=1 // pred_check_branch
      %99 = sbr.rel (%p97) target = $region21
    $region20: #{tpu_custom_call.1} parent=1 // pred_region
      %v100 = vld [vmem:[#allocation2] sm:$0xff]
      %v101 = vld [vmem:[#allocation2 + $0x8] sm:$0xff]
      %v102 = vld [vmem:[#allocation2 + $0x10] sm:$0xff]
      %v103 = vld [vmem:[%s2] sm:$0x1]
      %v105 = vlaneseq
      %v106 = vshrl.u32 %v105, 7
      %v107 = vsub.s32 0, %v106
      %v108 = vrot.slane %v103, %v107
      %v110 = vadd.f32 %v100, %v108
      %v111 = vadd.f32 %v101, %v108
      %v112 = vadd.f32 %v102, %v108
      %113 = vst.msk [vmem:[#allocation3] sm:$0xff] %vm93, %v110
      %114 = vst.msk [vmem:[#allocation3 + $0x8] sm:$0xff] %vm93, %v111
      %115 = vst.msk [vmem:[#allocation3 + $0x10] sm:$0xff] %vm93, %v112
    $region21: #{tpu_custom_call.1} parent=1 // pred_fallthru
      _
    // Predicated region
    $region22: #{tpu_custom_call.1} parent=1 // pred_check
      _
    $region23: #{tpu_custom_call.1} parent=1 // pred_check_branch
      %117 = sbr.rel (0) target = $region25
    $region24: #{tpu_custom_call.1} parent=1 // pred_region
      %s119 = ssub.s32 384, 384
      %120 = vsyncadd [#allocation4], %s119
      %s121 = sshll.u32 [#allocation3], 4
      %s122 = int_to_ptr.vmem [resolvable:$true] %s121
      %127 = dma.vmem_to_hbm [thread:$0]  %s122, 384, %s3, [#allocation4], 128, 128, 8
    $region25: #{tpu_custom_call.1} parent=1 // pred_fallthru
      _
    // Predicated region
    $region26: #{tpu_custom_call.1} parent=1 // pred_check
      _
    $region27: #{tpu_custom_call.1} parent=1 // pred_check_branch
      %129 = sbr.rel (0) target = $region29
    $region28: #{tpu_custom_call.1} parent=1 // pred_region
      %130 = dma.done [#allocation4], 384
    $region29: #{tpu_custom_call.1} parent=1 // pred_fallthru
      _
    %131 = vsyncpa [#allocation4], 1

// kernel: tpu_custom_call.1
$region0: #{tpu_custom_call.1}
  #allocation0 [shape = 'u32[]', space=smem, size = 0x4, offset = 0x4, fixed_abs, tag = 'smem constant byte address 0x4 - core index']
  #allocation1 [shape = 'u32[144,128]{1,0:T(1,128)}', space=vmem, size = 0x12000, scoped, tag = 'internal scratch']
  #allocation2 [shape = 'f32[24,32]{1,0:T(8,128)}', space=vmem, size = 0x3000, scoped, tag = 'scratch operand']
  %s0 = inlined_call_operand.vmem [shape: f32[21,16], index: 0, kind: input, shape index: {}]
  %s1 = inlined_call_operand.vmem [shape: f32[16,32], index: 1, kind: input, shape index: {}]
  %s2 = inlined_call_operand.vmem [shape: f32[1,32], index: 2, kind: input, shape index: {}]
  %s3 = inlined_call_operand.hbm [shape: f32[21,32], index: 3, kind: output, shape index: {}]
  %s4 = sld [smem:[#allocation0]]
  $region30: #{tpu_custom_call.1} parent=0
    _
  %s6 = ssub.s32 1, %s4
  %s7 = scalar_select 0, %s6, %s4
  $region1: #{tpu_custom_call.1} parent=0
    #allocation3 [shape = 'u8[12288]{0}', space=vmem, size = 0x3000, scoped, tag = 'output window, operand 0, single buffered']
    #allocation4 [shape = 's32[1]{0}', space=sflag, size = 0x4, scoped, tag = 'scoped memory for tpu_custom_call.1']
    %8 = vsyncpa [#allocation4], 0
    // Predicated region
    $region2: #{tpu_custom_call.1} parent=1 // pred_check
      _
    $region3: #{tpu_custom_call.1} parent=1 // pred_check_branch
      %10 = sbr.rel (0) target = $region5
    $region4: #{tpu_custom_call.1} parent=1 // pred_region
      _
    $region5: #{tpu_custom_call.1} parent=1 // pred_fallthru
      _
    // Predicated region
    $region6: #{tpu_custom_call.1} parent=1 // pred_check
      _
    $region7: #{tpu_custom_call.1} parent=1 // pred_check_branch
      %12 = sbr.rel (0) target = $region9
    $region8: #{tpu_custom_call.1} parent=1 // pred_region
      _
    $region9: #{tpu_custom_call.1} parent=1 // pred_fallthru
      _
    // Predicated region
    $region10: #{tpu_custom_call.1} parent=1 // pred_check
      _
    $region11: #{tpu_custom_call.1} parent=1 // pred_check_branch
      %14 = sbr.rel (0) target = $region13
    $region12: #{tpu_custom_call.1} parent=1 // pred_region
      _
    $region13: #{tpu_custom_call.1} parent=1 // pred_fallthru
      _
    %p16 = scmp.eq.s32.totalorder 0, 0
    // Predicated region
    $region14: #{tpu_custom_call.1} parent=1 // pred_check
      %p17 = pneg %p16
    $region15: #{tpu_custom_call.1} parent=1 // pred_check_branch
      %19 = sbr.rel (%p17) target = $region17
    $region16: #{tpu_custom_call.1} parent=1 // pred_region
      %vm20 = vcmask 261120
      %21 = vst.msk [vmem:[#allocation2] sm:$0xff] %vm20, 0.0
      %22 = vst.msk [vmem:[#allocation2 + $0x8] sm:$0xff] %vm20, 0.0
      %23 = vst.msk [vmem:[#allocation2 + $0x10] sm:$0xff] %vm20, 0.0
    $region17: #{tpu_custom_call.1} parent=1 // pred_fallthru
      _
    %v24 = vld [vmem:[#allocation2] sm:$0xff]
    %v25 = vld [vmem:[#allocation2 + $0x8] sm:$0xff]
    %v26 = vld [vmem:[#allocation2 + $0x10] sm:$0xff]
    %v27 = vld [vmem:[%s0] sm:$0xff]
    %v28 = vld [vmem:[%s0 + $0x8] sm:$0xff]
    %v29 = vld [vmem:[%s0 + $0x10] sm:$0xff]
    %v30 = vpack.c.bf16 %v28, %v27
    %v31 = vpack.c.bf16 %v29, %v29
    %v32 = vld [vmem:[%s1] sm:$0xff]
    %v33 = vld [vmem:[%s1 + $0x8] sm:$0xff]
    %v34 = vpack.c.bf16 %v33, %v32
    %vm35 = vcmask 130048
    %v37 = vsel %vm35, %v30, 0
    %v40 = vsel %vm35, %v31, 0
    %42 = vmatprep.subr.bf16.mxu0 0
    %43 = vmatpush1.bf16.msra.mxu0 %v34
    %44 = vmatprep.subr.bf16.mxu0 0
    %45 = vmatpush1.bf16.msra.mxu0 0
    %46 = vmatprep.subr.bf16.mxu0 0
    %47 = vmatpush1.bf16.msra.mxu0 0
    %48 = vmatprep.subr.bf16.mxu0 0
    %49 = vmatpush1.bf16.msra.mxu0 0
    %50 = vmatprep.subr.bf16.mxu0 0
    %51 = vmatpush1.bf16.msra.mxu0 0
    %52 = vmatprep.subr.bf16.mxu0 0
    %53 = vmatpush1.bf16.msra.mxu0 0
    %54 = vmatprep.subr.bf16.mxu0 0
    %55 = vmatpush1.bf16.msra.mxu0 0
    %56 = vmatprep.subr.bf16.mxu0 0
    %57 = vmatpush1.bf16.msra.mxu0 0
    %58 = vmatprep.subr.bf16.mxu0 0
    %59 = vmatpush1.bf16.msra.mxu0 0
    %60 = vmatprep.subr.bf16.mxu0 0
    %61 = vmatpush1.bf16.msra.mxu0 0
    %62 = vmatprep.subr.bf16.mxu0 0
    %63 = vmatpush1.bf16.msra.mxu0 0
    %64 = vmatprep.subr.bf16.mxu0 0
    %65 = vmatpush1.bf16.msra.mxu0 0
    %66 = vmatprep.subr.bf16.mxu0 0
    %67 = vmatpush1.bf16.msra.mxu0 0
    %68 = vmatprep.subr.bf16.mxu0 0
    %69 = vmatpush1.bf16.msra.mxu0 0
    %70 = vmatprep.subr.bf16.mxu0 0
    %71 = vmatpush1.bf16.msra.mxu0 0
    %72 = vmatprep.subr.bf16.mxu0 0
    %73 = vmatpush1.bf16.msra.mxu0 0
    %74 = vmatprep.mubr.bf16.mxu0 0
    %75 = vmatmul.mubr.bf16.gmra.mrb[0].mxu0 %v37
    %v76 = vpop.f32.mrb[0].mxu0
    %v77 = vadd.f32 0.0, %v76
    %v78 = vpop.f32.mrb[0].mxu0
    %v79 = vpop.f32.mrb[0].mxu0
    %v80 = vadd.f32 0.0, %v79
    %v81 = vpop.f32.mrb[0].mxu0
    %82 = vmatprep.mubr.bf16.mxu0 0
    %83 = vmatmul.mubr.bf16.gmra.mrb[0].mxu0 %v40
    %v84 = vpop.f32.mrb[0].mxu0
    %v85 = vadd.f32 0.0, %v84
    %v86 = vpop.f32.mrb[0].mxu0
    %v87 = vpop.f32.mrb[0].mxu0
    %v88 = vpop.f32.mrb[0].mxu0
    %89 = vdwg.mxu0
    %v90 = vadd.f32 %v24, %v77
    %v91 = vadd.f32 %v25, %v80
    %v92 = vadd.f32 %v26, %v85
    %vm93 = vcmask 261120
    %94 = vst.msk [vmem:[#allocation2] sm:$0xff] %vm93, %v90
    %95 = vst.msk [vmem:[#allocation2 + $0x8] sm:$0xff] %vm93, %v91
    %96 = vst.msk [vmem:[#allocation2 + $0x10] sm:$0xff] %vm93, %v92
    // Predicated region
    $region18: #{tpu_custom_call.1} parent=1 // pred_check
      %p97 = pneg %p16
    $region19: #{tpu_custom_call.1} parent=1 // pred_check_branch
      %99 = sbr.rel (%p97) target = $region21
    $region20: #{tpu_custom_call.1} parent=1 // pred_region
      %v100 = vld [vmem:[#allocation2] sm:$0xff]
      %v101 = vld [vmem:[#allocation2 + $0x8] sm:$0xff]
      %v102 = vld [vmem:[#allocation2 + $0x10] sm:$0xff]
      %v103 = vld [vmem:[%s2] sm:$0x1]
      %v105 = vlaneseq
      %v106 = vshrl.u32 %v105, 7
      %v107 = vsub.s32 0, %v106
      %v108 = vrot.slane %v103, %v107
      %v110 = vadd.f32 %v100, %v108
      %v111 = vadd.f32 %v101, %v108
      %v112 = vadd.f32 %v102, %v108
      %113 = vst.msk [vmem:[#allocation3] sm:$0xff] %vm93, %v110
      %114 = vst.msk [vmem:[#allocation3 + $0x8] sm:$0xff] %vm93, %v111
      %115 = vst.msk [vmem:[#allocation3 + $0x10] sm:$0xff] %vm93, %v112
    $region21: #{tpu_custom_call.1} parent=1 // pred_fallthru
      _
    // Predicated region
    $region22: #{tpu_custom_call.1} parent=1 // pred_check
      _
    $region23: #{tpu_custom_call.1} parent=1 // pred_check_branch
      %117 = sbr.rel (0) target = $region25
    $region24: #{tpu_custom_call.1} parent=1 // pred_region
      %s119 = ssub.s32 384, 384
      %120 = vsyncadd [#allocation4], %s119
      %s121 = sshll.u32 [#allocation3], 4
      %s122 = int_to_ptr.vmem [resolvable:$true] %s121
      %127 = dma.vmem_to_hbm [thread:$0]  %s122, 384, %s3, [#allocation4], 128, 128, 8
    $region25: #{tpu_custom_call.1} parent=1 // pred_fallthru
      _
    // Predicated region
    $region26: #{tpu_custom_call.1} parent=1 // pred_check
      _
    $region27: #{tpu_custom_call.1} parent=1 // pred_check_branch
      %129 = sbr.rel (0) target = $region29
    $region28: #{tpu_custom_call.1} parent=1 // pred_region
      %130 = dma.done [#allocation4], 384
    $region29: #{tpu_custom_call.1} parent=1 // pred_fallthru
      _
    %131 = vsyncpa [#allocation4], 1

</llo_original>
